<compile_context>
chip_gen: v5e
topology: v5e:2x2
jax: 0.10.0
libtpu: 0.0.40
codegen_flags: <defaults>
</compile_context>

<pallas_src>
import functools

import jax
import jax.numpy as jnp
from jax.experimental import pallas as pl
from jax.experimental.pallas import tpu as pltpu

# --- deterministic "qconfig" parameters (synthetic; would come from the observers) ---
QMIN, QMAX = 0.0, 255.0            # uint8 activation quantization
PRE_SCALE, PRE_ZP = 0.02, 128.0    # pre_fake_quant qparams
IN_SCALE, IN_ZP = 0.05, 255.0      # input_fake_quant qparams (X <= 0 after max-sub)

PRE_INV_SCALE = 1.0 / PRE_SCALE    # constant-reciprocal multiplies (no VPU divide);
IN_INV_SCALE = 1.0 / IN_SCALE      #   matches PyTorch fake_quantize (inv_scale mult)
RATIO = PRE_SCALE * IN_INV_SCALE   # folded dequant->requant scale for the max-sub fold

# Dropping the upper clamp in the second quant relies on IN_ZP == QMAX
# (after max-subtraction X <= 0, so X/IN_SCALE + IN_ZP <= QMAX always).
assert IN_ZP == QMAX
# exp(-IN_ZP*IN_SCALE) is folded out of the LUT (cancels in the normalization);
# the kernel then evaluates exp(q*IN_SCALE) with q <= QMAX, which must not overflow f32.
assert QMAX * IN_SCALE < 80.0

BLOCK_VMEM_BYTES = 2 * 1024 * 1024   # padded-VMEM footprint per pipeline buffer
VMEM_LIMIT_BYTES = 32 * 1024 * 1024  # safe on v5e/v6e (128 MiB) and v7x (64 MiB)


def _cdiv(a, b):
    return -(-a // b)


def _round_up(a, b):
    return _cdiv(a, b) * b


def qsoftmax_kernel(x_ref, o_ref, *, transposed_compute):
    """Quantized softmax over one (rows_tile, D) block; softmax axis is D.

    transposed_compute=True  (D < 128): the block is transposed (XLU, otherwise idle)
    to a lane-dense (D, rows_tile) layout so every elementwise op runs on fully
    occupied vregs, then transposed back before the store.
    transposed_compute=False (D >= 128): reduce over the lane axis directly.
    """
    x = x_ref[...].astype(jnp.float32)
    if transposed_compute:
        x = x.T                       # (rows_tile, D) -> (D, rows_tile)
        axis = 0
    else:
        axis = -1

    # 1) pre_fake_quant: quantize only (the dequant is folded into RATIO below).
    xq = jnp.clip(jnp.round(x * PRE_INV_SCALE + PRE_ZP), QMIN, QMAX)

    # 2)+3) max-subtraction in the quantized domain with both scales folded:
    #   ((xq-zp)*s_pre - max((xq-zp)*s_pre)) / s_in == (xq - max(xq)) * (s_pre/s_in)
    d = xq - jnp.max(xq, axis=axis, keepdims=True)          # integer-valued, <= 0
    # upper clamp is redundant here (d <= 0 and IN_ZP == QMAX).
    xq2 = jnp.round(jnp.maximum(d * RATIO + IN_ZP, QMIN))

    # 4) LUT: map[X_-qmin] = exp((X_-zp)*s_in); the constant exp(-zp*s_in) cancels in
    #    the normalization, so it is folded out (guarded by the assert above).
    y = jnp.exp(xq2 * IN_SCALE)

    # 5) normalize: one exact divide per row, broadcast multiply over the row.
    out = y * (1.0 / jnp.sum(y, axis=axis, keepdims=True))

    if transposed_compute:
        out = out.T
    o_ref[...] = out.astype(o_ref.dtype)


def _pick_row_tile(rows, D, itemsize):
    """Rows per block: respect layout alignment, a ~2 MiB padded-VMEM budget per
    pipeline buffer, and aim for >= 2 grid steps (v7x megacore) when possible."""
    if D < 128:
        align = 128                      # rows become lanes after the in-kernel transpose
    else:
        align = max(8, 32 // itemsize)   # sublane tile (8 for f32, 16 for bf16)
    vmem_row_bytes = _round_up(D, 128) * itemsize   # lane-padded footprint of one row
    cap = max(align, (BLOCK_VMEM_BYTES // vmem_row_bytes) // align * align)
    # at least 2 grid steps when the tensor spans more than one aligned tile
    half = _round_up(_cdiv(rows, 2), align)
    tile = min(cap, half)
    if tile >= rows:
        tile = rows          # single full-extent block (full array dims are always legal)
    return tile


def _launch(x2, row_tile, transposed_compute):
    rows, D = x2.shape
    grid = (_cdiv(rows, row_tile),)
    n = rows * D
    cost = pl.CostEstimate(
        flops=10 * n,                                   # rough VPU op count
        transcendentals=n,                              # one exp per element
        bytes_accessed=2 * n * x2.dtype.itemsize,       # stream in + stream out
    )
    return pl.pallas_call(
        functools.partial(qsoftmax_kernel, transposed_compute=transposed_compute),
        out_shape=jax.ShapeDtypeStruct((rows, D), x2.dtype),
        grid_spec=pltpu.PrefetchScalarGridSpec(
            num_scalar_prefetch=0,
            grid=grid,
            in_specs=[pl.BlockSpec((row_tile, D), lambda i: (i, 0))],
            out_specs=pl.BlockSpec((row_tile, D), lambda i: (i, 0)),
        ),
        compiler_params=pltpu.CompilerParams(
            dimension_semantics=("parallel",),
            vmem_limit_bytes=VMEM_LIMIT_BYTES,
        ),
        cost_estimate=cost,
    )(x2)


def my_softmax_qat(x):
    """Quantized softmax over the last dim (fake_quant_enabled inference branch)."""
    orig_shape = x.shape
    D = orig_shape[-1]
    rows = 1
    for s in orig_shape[:-1]:
        rows *= s
    x2 = x.reshape(rows, D)                 # contiguous reshape: no data movement
    tile = _pick_row_tile(rows, D, x2.dtype.itemsize)
    out2 = _launch(x2, tile, transposed_compute=(D < 128))
    return out2.reshape(orig_shape)


def _reference(x):
    """Pure-JAX reference of the same branch (module-faithful formulation)."""
    x = x.astype(jnp.float32)
    # pre_fake_quant: PyTorch fake_quantize_per_tensor_affine multiplies by inv_scale
    xq = jnp.clip(jnp.round(x * PRE_INV_SCALE + PRE_ZP), QMIN, QMAX)
    x = (xq - PRE_ZP) * PRE_SCALE
    x = x - jnp.max(x, axis=-1, keepdims=True)
    xq2 = jnp.round(jnp.clip(x / IN_SCALE + IN_ZP, QMIN, QMAX))
    y = jnp.exp((xq2 - IN_ZP) * IN_SCALE)
    return y / jnp.sum(y, axis=-1, keepdims=True)


if __name__ == "__main__":
    key = jax.random.PRNGKey(0)

    # NCHW input, softmax over the last (W) dim — exercises the narrow-D
    # (in-kernel transposed, lane-dense) path.
    x = jax.random.normal(key, (2, 4, 16, 16), dtype=jnp.float32) * 2.0
    out = jax.block_until_ready(my_softmax_qat(x))
    ref = _reference(x)
    assert out.shape == x.shape
    assert jnp.allclose(out, ref, atol=1e-3, rtol=1e-3), "mismatch vs reference (narrow D)"
    assert jnp.allclose(jnp.sum(out, axis=-1), 1.0, atol=1e-3)

    # Wide softmax axis — exercises the D >= 128 lane-reduction path with a 2-step grid.
    x_wide = jax.random.normal(jax.random.PRNGKey(0), (2, 3, 8, 256), dtype=jnp.float32) * 2.0
    out_w = jax.block_until_ready(my_softmax_qat(x_wide))
    ref_w = _reference(x_wide)
    assert out_w.shape == x_wide.shape
    assert jnp.allclose(out_w, ref_w, atol=1e-3, rtol=1e-3), "mismatch vs reference (wide D)"
    assert jnp.allclose(jnp.sum(out_w, axis=-1), 1.0, atol=1e-3)

    print("KERNEL_OK")
</pallas_src>

<mosaic_0001>
module attributes {stable_mosaic.version = 11 : i64} {
  func.func @qsoftmax_kernel(%arg0: i32, %arg1: memref<128x16xf32, #tpu.memory_space<vmem>>, %arg2: memref<128x16xf32, #tpu.memory_space<vmem>>) attributes {dimension_semantics = [#tpu.dimension_semantics<parallel>], iteration_bounds = array<i64: 1>, scalar_prefetch = 0 : i64, scratch_operands = 0 : i64, tpu.core_type = #tpu.core_type<tc>, window_params = [{transform_indices = @transform_0, window_bounds = array<i64: 128, 16>}, {transform_indices = @transform_1, window_bounds = array<i64: 128, 16>}]} {
    %c0 = arith.constant 0 : index
    %c0_0 = arith.constant 0 : index
    %0 = vector.load %arg1[%c0, %c0_0] : memref<128x16xf32, #tpu.memory_space<vmem>>, vector<128x16xf32>
    %1 = tpu.transpose %0, [1, 0] : vector<128x16xf32> -> vector<16x128xf32>
    %cst = arith.constant 5.000000e+01 : f32
    %2 = vector.broadcast %cst : f32 to vector<16x128xf32>
    %3 = arith.mulf %1, %2 : vector<16x128xf32>
    %cst_1 = arith.constant 1.280000e+02 : f32
    %4 = vector.broadcast %cst_1 : f32 to vector<16x128xf32>
    %5 = arith.addf %3, %4 : vector<16x128xf32>
    %6 = math.roundeven %5 : vector<16x128xf32>
    %cst_2 = arith.constant 0.000000e+00 : f32
    %cst_3 = arith.constant 2.550000e+02 : f32
    %7 = vector.broadcast %cst_2 : f32 to vector<16x128xf32>
    %8 = arith.maximumf %7, %6 : vector<16x128xf32>
    %9 = vector.broadcast %cst_3 : f32 to vector<16x128xf32>
    %10 = arith.minimumf %9, %8 : vector<16x128xf32>
    %cst_4 = arith.constant dense<0xFF800000> : vector<128xf32>
    %11 = vector.multi_reduction <maximumf>, %10, %cst_4 [0] : vector<16x128xf32> to vector<128xf32>
    %12 = vector.shape_cast %11 : vector<128xf32> to vector<1x128xf32>
    %13 = vector.broadcast %12 : vector<1x128xf32> to vector<16x128xf32>
    %14 = arith.subf %10, %13 : vector<16x128xf32>
    %cst_5 = arith.constant 4.000000e-01 : f32
    %15 = vector.broadcast %cst_5 : f32 to vector<16x128xf32>
    %16 = arith.mulf %14, %15 : vector<16x128xf32>
    %cst_6 = arith.constant 2.550000e+02 : f32
    %17 = vector.broadcast %cst_6 : f32 to vector<16x128xf32>
    %18 = arith.addf %16, %17 : vector<16x128xf32>
    %cst_7 = arith.constant 0.000000e+00 : f32
    %19 = vector.broadcast %cst_7 : f32 to vector<16x128xf32>
    %20 = arith.maximumf %18, %19 : vector<16x128xf32>
    %21 = math.roundeven %20 : vector<16x128xf32>
    %cst_8 = arith.constant 5.000000e-02 : f32
    %22 = vector.broadcast %cst_8 : f32 to vector<16x128xf32>
    %23 = arith.mulf %21, %22 : vector<16x128xf32>
    %24 = math.exp %23 : vector<16x128xf32>
    %cst_9 = arith.constant dense<0.000000e+00> : vector<128xf32>
    %25 = vector.multi_reduction <add>, %24, %cst_9 [0] : vector<16x128xf32> to vector<128xf32>
    %26 = vector.shape_cast %25 : vector<128xf32> to vector<1x128xf32>
    %cst_10 = arith.constant 1.000000e+00 : f32
    %27 = vector.broadcast %cst_10 : f32 to vector<1x128xf32>
    %28 = arith.divf %27, %26 : vector<1x128xf32>
    %29 = vector.broadcast %28 : vector<1x128xf32> to vector<16x128xf32>
    %30 = arith.mulf %24, %29 : vector<16x128xf32>
    %31 = tpu.transpose %30, [1, 0] : vector<16x128xf32> -> vector<128x16xf32>
    %c0_11 = arith.constant 0 : index
    %c0_12 = arith.constant 0 : index
    %32 = vector.load %arg2[%c0_11, %c0_12] : memref<128x16xf32, #tpu.memory_space<vmem>>, vector<128x16xf32>
    tpu.vector_store %arg2[%c0_11, %c0_12], %31 {strides = array<i32>} : memref<128x16xf32, #tpu.memory_space<vmem>>, vector<128x16xf32>,
    return
  }
  func.func @transform_0(%arg0: i32) -> (i32, i32) {
    %c0_i32 = arith.constant 0 : i32
    %c0_i32_0 = arith.constant 0 : i32
    return %arg0, %c0_i32 : i32, i32
  }
  func.func @transform_1(%arg0: i32) -> (i32, i32) {
    %c0_i32 = arith.constant 0 : i32
    %c0_i32_0 = arith.constant 0 : i32
    return %arg0, %c0_i32 : i32, i32
  }
}

</mosaic_0001>

<llo_original>
// kernel: tpu_custom_call.1
$region0: #{tpu_custom_call.1}
  #allocation0 [shape = 'u32[]', space=smem, size = 0x4, offset = 0x4, fixed_abs, tag = 'smem constant byte address 0x4 - core index']
  #allocation1 [shape = 'u32[72,128]{1,0:T(1,128)}', space=vmem, size = 0x9000, scoped, tag = 'internal scratch']
  %s0 = inlined_call_operand.vmem [shape: f32[128,16], index: 0, kind: input, shape index: {}]
  %s1 = inlined_call_operand.vmem [shape: f32[128,16], index: 1, kind: output, shape index: {}]
  %s2 = sld [smem:[#allocation0]]
  $region14: #{tpu_custom_call.1} parent=0
    _
  %s4 = ssub.s32 1, %s2
  %s5 = scalar_select 0, %s4, %s2
  // Predicated region
  $region2: #{tpu_custom_call.1} parent=0 // pred_check
    _
  $region3: #{tpu_custom_call.1} parent=0 // pred_check_branch
    %7 = sbr.rel (0) target = $region5
  $region4: #{tpu_custom_call.1} parent=0 // pred_region
    _
  $region5: #{tpu_custom_call.1} parent=0 // pred_fallthru
    _
  %v8 = vld [vmem:[%s0] sm:$0xff]
  %v9 = vld [vmem:[%s0 + $0x8] sm:$0xff]
  %v10 = vld [vmem:[%s0 + $0x10] sm:$0xff]
  %v11 = vld [vmem:[%s0 + $0x18] sm:$0xff]
  %v12 = vld [vmem:[%s0 + $0x20] sm:$0xff]
  %v13 = vld [vmem:[%s0 + $0x28] sm:$0xff]
  %v14 = vld [vmem:[%s0 + $0x30] sm:$0xff]
  %v15 = vld [vmem:[%s0 + $0x38] sm:$0xff]
  %v16 = vld [vmem:[%s0 + $0x40] sm:$0xff]
  %v17 = vld [vmem:[%s0 + $0x48] sm:$0xff]
  %v18 = vld [vmem:[%s0 + $0x50] sm:$0xff]
  %v19 = vld [vmem:[%s0 + $0x58] sm:$0xff]
  %v20 = vld [vmem:[%s0 + $0x60] sm:$0xff]
  %v21 = vld [vmem:[%s0 + $0x68] sm:$0xff]
  %v22 = vld [vmem:[%s0 + $0x70] sm:$0xff]
  %v23 = vld [vmem:[%s0 + $0x78] sm:$0xff]
  %24 = vxpose.xlu0.b32.start [1/16] %v8, 128
  %25 = vxpose.xlu0.b32.cont [2/16] %v9, 128
  %26 = vxpose.xlu0.b32.cont [3/16] %v10, 128
  %27 = vxpose.xlu0.b32.cont [4/16] %v11, 128
  %28 = vxpose.xlu0.b32.cont [5/16] %v12, 128
  %29 = vxpose.xlu0.b32.cont [6/16] %v13, 128
  %30 = vxpose.xlu0.b32.cont [7/16] %v14, 128
  %31 = vxpose.xlu0.b32.cont [8/16] %v15, 128
  %32 = vxpose.xlu0.b32.cont [9/16] %v16, 128
  %33 = vxpose.xlu0.b32.cont [10/16] %v17, 128
  %34 = vxpose.xlu0.b32.cont [11/16] %v18, 128
  %35 = vxpose.xlu0.b32.cont [12/16] %v19, 128
  %36 = vxpose.xlu0.b32.cont [13/16] %v20, 128
  %37 = vxpose.xlu0.b32.cont [14/16] %v21, 128
  %38 = vxpose.xlu0.b32.cont [15/16] %v22, 128
  %39 = vxpose.xlu0.b32.end [16/16] %v23, 128
  %v40 = vpop.trf.xlu0
  %v41 = vpop.trf.xlu0
  %v42 = vpop.trf.xlu0
  %v43 = vpop.trf.xlu0
  %v44 = vpop.trf.xlu0
  %v45 = vpop.trf.xlu0
  %v46 = vpop.trf.xlu0
  %v47 = vpop.trf.xlu0
  %v48 = vpop.trf.xlu0
  %v49 = vpop.trf.xlu0
  %v50 = vpop.trf.xlu0
  %v51 = vpop.trf.xlu0
  %v52 = vpop.trf.xlu0
  %v53 = vpop.trf.xlu0
  %v54 = vpop.trf.xlu0
  %v55 = vpop.trf.xlu0
  %v56 = vmul.f32 %v40, 50.0
  %v57 = vmul.f32 %v41, 50.0
  %v58 = vadd.f32 %v56, 128.0
  %v59 = vadd.f32 %v57, 128.0
  %v60 = vround.ne.pseudo %v58
  %v61 = vround.ne.pseudo %v59
  %v62 = vmax.f32 %v60, 0.0
  %v63 = vmax.f32 %v61, 0.0
  %v64 = vmin.f32 %v62, 255.0
  %v65 = vmin.f32 %v63, 255.0
  %v66 = vmax.f32 %v64, %v65
  %v67 = vrot.slane %v66, 4
  %v68 = vmax.f32 %v66, %v67
  %v69 = vrot.slane %v68, 2
  %v70 = vmax.f32 %v68, %v69
  %v71 = vrot.slane %v70, 1
  %v72 = vmax.f32 %v70, %v71
  %v73 = vsub.f32 %v64, %v72
  %v74 = vsub.f32 %v65, %v72
  %v75 = vmul.f32 %v73, 0.4
  %v76 = vmul.f32 %v74, 0.4
  %v77 = vadd.f32 %v75, 255.0
  %v78 = vadd.f32 %v76, 255.0
  %v79 = vmax.f32 %v77, 0.0
  %v80 = vmax.f32 %v78, 0.0
  %v81 = vround.ne.pseudo %v79
  %v82 = vround.ne.pseudo %v80
  %v83 = vmul.f32 %v81, 0.05
  %v84 = vmul.f32 %v82, 0.05
  %v85 = vmul.f32 %v83, 1.442695
  %v86 = vpow.pop %v85
  %v87 = vmul.f32 %v84, 1.442695
  %v88 = vpow.pop %v87
  %v89 = vadd.f32 %v86, %v88
  %v90 = vrot.slane %v89, 4
  %v91 = vadd.f32 %v89, %v90
  %v92 = vrot.slane %v91, 2
  %v93 = vadd.f32 %v91, %v92
  %v94 = vrot.slane %v93, 1
  %v95 = vadd.f32 %v93, %v94
  %v96 = vrcp.pop %v95
  %v97 = vmul.f32 %v95, %v96
  %v98 = vsub.f32 1.0, %v97
  %v99 = vmul.f32 %v96, %v98
  %v100 = vadd.f32 %v96, %v99
  %vm101 = vweird.f32 %v95
  %vm102 = vweird.f32 %v96
  %vm103 = vmor %vm101, %vm102
  %v104 = vsel %vm103, %v96, %v100
  %v105 = vand.u32 2147483647, %v95
  %vm106 = vcmp.eq.f32.partialorder %v105, 8.507059e+37
  %v107 = vand.u32 %v95, 2147483648
  %v108 = vor.u32 1.1754944e-38, %v107
  %v109 = vsel %vm106, %v108, %v104
  %v110 = vmul.f32 1.0, %v109
  %v111 = vmul.f32 %v86, %v110
  %v112 = vmul.f32 %v88, %v110
  %113 = vxpose.xlu0.b32.start [1/16] %v111, 128
  %114 = vxpose.xlu0.b32.cont [2/16] %v112, 128
  %115 = vxpose.xlu0.b32.cont [3/16] 0.0, 128
  %116 = vxpose.xlu0.b32.cont [4/16] 0.0, 128
  %117 = vxpose.xlu0.b32.cont [5/16] 0.0, 128
  %118 = vxpose.xlu0.b32.cont [6/16] 0.0, 128
  %119 = vxpose.xlu0.b32.cont [7/16] 0.0, 128
  %120 = vxpose.xlu0.b32.cont [8/16] 0.0, 128
  %121 = vxpose.xlu0.b32.cont [9/16] 0.0, 128
  %122 = vxpose.xlu0.b32.cont [10/16] 0.0, 128
  %123 = vxpose.xlu0.b32.cont [11/16] 0.0, 128
  %124 = vxpose.xlu0.b32.cont [12/16] 0.0, 128
  %125 = vxpose.xlu0.b32.cont [13/16] 0.0, 128
  %126 = vxpose.xlu0.b32.cont [14/16] 0.0, 128
  %127 = vxpose.xlu0.b32.cont [15/16] 0.0, 128
  %128 = vxpose.xlu0.b32.end [16/16] 0.0, 128
  %v129 = vpop.trf.xlu0
  %v130 = vpop.trf.xlu0
  %v131 = vpop.trf.xlu0
  %v132 = vpop.trf.xlu0
  %v133 = vpop.trf.xlu0
  %v134 = vpop.trf.xlu0
  %v135 = vpop.trf.xlu0
  %v136 = vpop.trf.xlu0
  %v137 = vpop.trf.xlu0
  %v138 = vpop.trf.xlu0
  %v139 = vpop.trf.xlu0
  %v140 = vpop.trf.xlu0
  %v141 = vpop.trf.xlu0
  %v142 = vpop.trf.xlu0
  %v143 = vpop.trf.xlu0
  %v144 = vpop.trf.xlu0
  %vm145 = vcmask 130048
  %146 = vst.msk [vmem:[%s1] sm:$0xff] %vm145, %v129
  %147 = vst.msk [vmem:[%s1 + $0x8] sm:$0xff] %vm145, %v130
  %148 = vst.msk [vmem:[%s1 + $0x10] sm:$0xff] %vm145, %v131
  %149 = vst.msk [vmem:[%s1 + $0x18] sm:$0xff] %vm145, %v132
  %150 = vst.msk [vmem:[%s1 + $0x20] sm:$0xff] %vm145, %v133
  %151 = vst.msk [vmem:[%s1 + $0x28] sm:$0xff] %vm145, %v134
  %152 = vst.msk [vmem:[%s1 + $0x30] sm:$0xff] %vm145, %v135
  %153 = vst.msk [vmem:[%s1 + $0x38] sm:$0xff] %vm145, %v136
  %154 = vst.msk [vmem:[%s1 + $0x40] sm:$0xff] %vm145, %v137
  %155 = vst.msk [vmem:[%s1 + $0x48] sm:$0xff] %vm145, %v138
  %156 = vst.msk [vmem:[%s1 + $0x50] sm:$0xff] %vm145, %v139
  %157 = vst.msk [vmem:[%s1 + $0x58] sm:$0xff] %vm145, %v140
  %158 = vst.msk [vmem:[%s1 + $0x60] sm:$0xff] %vm145, %v141
  %159 = vst.msk [vmem:[%s1 + $0x68] sm:$0xff] %vm145, %v142
  %160 = vst.msk [vmem:[%s1 + $0x70] sm:$0xff] %vm145, %v143
  %161 = vst.msk [vmem:[%s1 + $0x78] sm:$0xff] %vm145, %v144
  // Predicated region
  $region6: #{tpu_custom_call.1} parent=0 // pred_check
    _
  $region7: #{tpu_custom_call.1} parent=0 // pred_check_branch
    %163 = sbr.rel (0) target = $region9
  $region8: #{tpu_custom_call.1} parent=0 // pred_region
    _
  $region9: #{tpu_custom_call.1} parent=0 // pred_fallthru
    _
  // Predicated region
  $region10: #{tpu_custom_call.1} parent=0 // pred_check
    _
  $region11: #{tpu_custom_call.1} parent=0 // pred_check_branch
    %165 = sbr.rel (0) target = $region13
  $region12: #{tpu_custom_call.1} parent=0 // pred_region
    _
  $region13: #{tpu_custom_call.1} parent=0 // pred_fallthru
    _

</llo_original>
